<compile_context>
chip_gen: v5e
topology: v5e:2x2
jax: 0.10.0
libtpu: 0.0.40
codegen_flags: <defaults>
</compile_context>

<pallas_src>
import jax
import jax.numpy as jnp
from jax.experimental import pallas as pl
from jax.experimental.pallas import tpu as pltpu

HIDDEN1 = 128        # layer-1 output width (already lane-aligned)
HIDDEN2 = 64         # logical layer-2 output width
LANE = 128           # lane-dense padded width for hidden-2 / output
MAX_TILE_B = 8192    # batch tile cap (amortizes per-grid-step overhead)
ROW_ALIGN = 16       # bf16 output packs 16 rows per sublane group
MIN_GRID = 2         # keep >=2 tiles so "parallel" can use both v7x TensorCores


def _cdiv(a, b):
    return (a + b - 1) // b


def _round_up(x, m):
    return _cdiv(x, m) * m


def _vmem_limit_bytes():
    """Per-generation scoped VMEM budget: half of physical VMEM, capped at 96 MiB.
    v7x (64 MiB physical) -> 32 MiB; v5e/v6e (128 MiB) -> 64 MiB."""
    try:
        cap = pltpu.get_tpu_info().vmem_capacity_bytes
    except Exception:
        cap = 64 * 1024 * 1024  # conservative (v7x-sized) fallback
    return int(min(cap // 2, 96 * 1024 * 1024))


def _mlp_kernel(x_ref, w1_ref, b1_ref, w2_ref, b2_ref, w3_ref, b3_ref, mean_ref):
    # In-kernel bf16 cast of the streamed f32 states (VALU has plenty of slack).
    x = x_ref[...].astype(jnp.bfloat16)
    # Layer 1: [TB, S](bf16) @ [S, 128](bf16) -> f32 acc, bias + ReLU in f32.
    h1 = jnp.dot(x, w1_ref[...], preferred_element_type=jnp.float32)
    h1 = jnp.maximum(h1 + b1_ref[...], 0.0)
    # Layer 2: [TB, 128] @ [128, 128] (cols 64..127 are zero padding).
    h2 = jnp.dot(h1.astype(jnp.bfloat16), w2_ref[...],
                 preferred_element_type=jnp.float32)
    h2 = jnp.maximum(h2 + b2_ref[...], 0.0)
    # Layer 3: [TB, 128] @ [128, 128] (rows 64.., cols A.. are zero padding).
    out = jnp.dot(h2.astype(jnp.bfloat16), w3_ref[...],
                  preferred_element_type=jnp.float32)
    # bf16 writeback halves the dominant HBM stream (output tile).
    mean_ref[...] = (out + b3_ref[...]).astype(mean_ref.dtype)


def init_params(key, state_dim, action_dim):
    """Logical (un-padded, f32) parameters, matching the PyTorch layout
    (weights stored transposed as [in, out]); log_std zeros like nn.Parameter."""
    k1, k2, k3 = jax.random.split(key, 3)
    w1 = jax.random.normal(k1, (state_dim, HIDDEN1), jnp.float32) * 0.1
    b1 = jnp.zeros((HIDDEN1,), jnp.float32)
    w2 = jax.random.normal(k2, (HIDDEN1, HIDDEN2), jnp.float32) * 0.1
    b2 = jnp.zeros((HIDDEN2,), jnp.float32)
    w3 = jax.random.normal(k3, (HIDDEN2, action_dim), jnp.float32) * 0.1
    b3 = jnp.zeros((action_dim,), jnp.float32)
    log_std = jnp.zeros((action_dim,), jnp.float32)
    return (w1, b1, w2, b2, w3, b3, log_std)


def pack_params(params):
    """Pad narrow dims to 128 lanes and cast MXU operands to bf16.
    Done once, outside the hot forward path."""
    w1, b1, w2, b2, w3, b3, log_std = params
    state_dim = w1.shape[0]
    action_dim = w3.shape[1]

    w1_p = w1.astype(jnp.bfloat16)                                    # (S, 128)
    b1_p = b1.reshape(1, HIDDEN1).astype(jnp.float32)                 # (1, 128)

    w2_p = jnp.zeros((HIDDEN1, LANE), jnp.float32).at[:, :HIDDEN2].set(w2)
    w2_p = w2_p.astype(jnp.bfloat16)                                  # (128, 128)
    b2_p = jnp.zeros((1, LANE), jnp.float32).at[0, :HIDDEN2].set(b2)

    w3_p = jnp.zeros((LANE, LANE), jnp.float32).at[:HIDDEN2, :action_dim].set(w3)
    w3_p = w3_p.astype(jnp.bfloat16)                                  # (128, 128)
    b3_p = jnp.zeros((1, LANE), jnp.float32).at[0, :action_dim].set(b3)

    return dict(w1=w1_p, b1=b1_p, w2=w2_p, b2=b2_p, w3=w3_p, b3=b3_p,
                log_std=log_std, state_dim=state_dim, action_dim=action_dim)


def ppo_policy_forward(states, packed):
    """Returns (mean, log_std), matching PPOPolicyNetwork.forward."""
    w1, b1, w2, b2 = packed["w1"], packed["b1"], packed["w2"], packed["b2"]
    w3, b3 = packed["w3"], packed["b3"]
    action_dim = packed["action_dim"]

    B, S = states.shape
    vmem_limit = _vmem_limit_bytes()

    # Per-row VMEM footprint estimate: double-buffered f32 input tile,
    # double-buffered bf16 output tile, plus f32 activation temporaries.
    bytes_per_row = 2 * S * 4 + 2 * LANE * 2 + 3 * LANE * 4
    vmem_tile_cap = max(ROW_ALIGN, (vmem_limit // 2) // bytes_per_row)
    max_tile = min(MAX_TILE_B, vmem_tile_cap)

    # Pick the tile from the batch size (avoid ~2x waste on awkward sizes),
    # and keep the grid >= 2 when possible so both v7x TensorCores are used.
    num_tiles = _cdiv(B, max_tile)
    if num_tiles < MIN_GRID and B >= MIN_GRID * ROW_ALIGN:
        num_tiles = MIN_GRID
    tile_b = _round_up(_cdiv(B, num_tiles), ROW_ALIGN)
    b_pad = tile_b * num_tiles

    x = states
    if b_pad != B:
        x = jnp.pad(x, ((0, b_pad - B), (0, 0)))  # only the leftover rows

    grid = (num_tiles,)

    # Advisory cost estimate for XLA's scheduler around the custom call.
    flops = 2 * b_pad * (S * HIDDEN1 + HIDDEN1 * LANE + LANE * LANE)
    bytes_accessed = (
        b_pad * S * 4                                        # streamed f32 states
        + (S * HIDDEN1 + HIDDEN1 * LANE + LANE * LANE) * 2   # bf16 weights
        + 3 * LANE * 4                                       # f32 biases
        + b_pad * LANE * 2                                   # bf16 output
    )

    mean_pad = pl.pallas_call(
        _mlp_kernel,
        out_shape=jax.ShapeDtypeStruct((b_pad, LANE), jnp.bfloat16),
        grid=grid,
        in_specs=[
            pl.BlockSpec((tile_b, S), lambda i: (i, 0)),        # streamed states
            pl.BlockSpec((S, HIDDEN1), lambda i: (0, 0)),       # resident weights
            pl.BlockSpec((1, HIDDEN1), lambda i: (0, 0)),
            pl.BlockSpec((HIDDEN1, LANE), lambda i: (0, 0)),
            pl.BlockSpec((1, LANE), lambda i: (0, 0)),
            pl.BlockSpec((LANE, LANE), lambda i: (0, 0)),
            pl.BlockSpec((1, LANE), lambda i: (0, 0)),
        ],
        out_specs=pl.BlockSpec((tile_b, LANE), lambda i: (i, 0)),
        compiler_params=pltpu.CompilerParams(
            dimension_semantics=("parallel",),
            vmem_limit_bytes=vmem_limit,
        ),
        cost_estimate=pl.CostEstimate(
            flops=flops, transcendentals=0, bytes_accessed=bytes_accessed),
    )(x, w1, b1, w2, b2, w3, b3)

    mean = mean_pad[:B, :action_dim].astype(jnp.float32)
    # log_std is a raw parameter returned as-is (no compute) — glue, not kernel.
    return mean, packed["log_std"]


def _reference_forward(states, params):
    w1, b1, w2, b2, w3, b3, log_std = params
    h1 = jnp.maximum(states @ w1 + b1, 0.0)
    h2 = jnp.maximum(h1 @ w2 + b2, 0.0)
    return h2 @ w3 + b3, log_std


if __name__ == "__main__":
    key = jax.random.PRNGKey(0)
    k_params, k_states = jax.random.split(key)

    B, state_dim, action_dim = 8, 32, 8
    params = init_params(k_params, state_dim, action_dim)
    packed = pack_params(params)
    states = jax.random.normal(k_states, (B, state_dim), jnp.float32)

    mean, log_std = ppo_policy_forward(states, packed)
    mean = jax.block_until_ready(mean)
    log_std = jax.block_until_ready(log_std)

    ref_mean, ref_log_std = _reference_forward(states, params)
    assert mean.shape == (B, action_dim)
    assert log_std.shape == (action_dim,)
    # bf16 MXU operands / bf16 output writeback with f32 accumulation ->
    # loosened tolerance vs the f32 reference.
    assert jnp.allclose(mean, ref_mean, atol=3e-2, rtol=3e-2), (
        float(jnp.max(jnp.abs(mean - ref_mean))))
    assert jnp.allclose(log_std, ref_log_std)

    print("KERNEL_OK")
</pallas_src>

<mosaic_0001>
module attributes {stable_mosaic.version = 11 : i64} {
  func.func @_mlp_kernel(%arg0: i32, %arg1: memref<16x32xf32, #tpu.memory_space<vmem>>, %arg2: memref<32x128xbf16, #tpu.memory_space<vmem>>, %arg3: memref<1x128xf32, #tpu.memory_space<vmem>>, %arg4: memref<128x128xbf16, #tpu.memory_space<vmem>>, %arg5: memref<1x128xf32, #tpu.memory_space<vmem>>, %arg6: memref<128x128xbf16, #tpu.memory_space<vmem>>, %arg7: memref<1x128xf32, #tpu.memory_space<vmem>>, %arg8: memref<16x128xbf16, #tpu.memory_space<vmem>>) attributes {dimension_semantics = [#tpu.dimension_semantics<parallel>], iteration_bounds = array<i64: 1>, scalar_prefetch = 0 : i64, scratch_operands = 0 : i64, tpu.core_type = #tpu.core_type<tc>, window_params = [{transform_indices = @transform_0, window_bounds = array<i64: 16, 32>}, {pipeline_mode = #tpu.pipeline_mode<synchronous>, transform_indices = @transform_1, window_bounds = array<i64: 32, 128>}, {pipeline_mode = #tpu.pipeline_mode<synchronous>, transform_indices = @transform_2, window_bounds = array<i64: 1, 128>}, {pipeline_mode = #tpu.pipeline_mode<synchronous>, transform_indices = @transform_3, window_bounds = array<i64: 128, 128>}, {pipeline_mode = #tpu.pipeline_mode<synchronous>, transform_indices = @transform_4, window_bounds = array<i64: 1, 128>}, {pipeline_mode = #tpu.pipeline_mode<synchronous>, transform_indices = @transform_5, window_bounds = array<i64: 128, 128>}, {pipeline_mode = #tpu.pipeline_mode<synchronous>, transform_indices = @transform_6, window_bounds = array<i64: 1, 128>}, {transform_indices = @transform_7, window_bounds = array<i64: 16, 128>}]} {
    %c0 = arith.constant 0 : index
    %c0_0 = arith.constant 0 : index
    %0 = vector.load %arg1[%c0, %c0_0] : memref<16x32xf32, #tpu.memory_space<vmem>>, vector<16x32xf32>
    %1 = arith.truncf %0 : vector<16x32xf32> to vector<16x32xbf16>
    %c0_1 = arith.constant 0 : index
    %c0_2 = arith.constant 0 : index
    %2 = vector.load %arg2[%c0_1, %c0_2] : memref<32x128xbf16, #tpu.memory_space<vmem>>, vector<32x128xbf16>
    %cst = arith.constant dense<0.000000e+00> : vector<16x128xf32>
    %3 = tpu.matmul %1, %2, %cst {dimension_numbers = #tpu.dot_dimension_numbers<[1], [0], [0], [1], [0, 0, 1, 1], [], []>} : vector<16x32xbf16>, vector<32x128xbf16>, vector<16x128xf32> -> vector<16x128xf32>
    %c0_3 = arith.constant 0 : index
    %c0_4 = arith.constant 0 : index
    %4 = vector.load %arg3[%c0_3, %c0_4] : memref<1x128xf32, #tpu.memory_space<vmem>>, vector<1x128xf32>
    %5 = vector.broadcast %4 : vector<1x128xf32> to vector<16x128xf32>
    %6 = arith.addf %3, %5 : vector<16x128xf32>
    %cst_5 = arith.constant 0.000000e+00 : f32
    %7 = vector.broadcast %cst_5 : f32 to vector<16x128xf32>
    %8 = arith.maximumf %6, %7 : vector<16x128xf32>
    %9 = arith.truncf %8 : vector<16x128xf32> to vector<16x128xbf16>
    %c0_6 = arith.constant 0 : index
    %c0_7 = arith.constant 0 : index
    %10 = vector.load %arg4[%c0_6, %c0_7] : memref<128x128xbf16, #tpu.memory_space<vmem>>, vector<128x128xbf16>
    %cst_8 = arith.constant dense<0.000000e+00> : vector<16x128xf32>
    %11 = tpu.matmul %9, %10, %cst_8 {dimension_numbers = #tpu.dot_dimension_numbers<[1], [0], [0], [1], [0, 0, 1, 1], [], []>} : vector<16x128xbf16>, vector<128x128xbf16>, vector<16x128xf32> -> vector<16x128xf32>
    %c0_9 = arith.constant 0 : index
    %c0_10 = arith.constant 0 : index
    %12 = vector.load %arg5[%c0_9, %c0_10] : memref<1x128xf32, #tpu.memory_space<vmem>>, vector<1x128xf32>
    %13 = vector.broadcast %12 : vector<1x128xf32> to vector<16x128xf32>
    %14 = arith.addf %11, %13 : vector<16x128xf32>
    %cst_11 = arith.constant 0.000000e+00 : f32
    %15 = vector.broadcast %cst_11 : f32 to vector<16x128xf32>
    %16 = arith.maximumf %14, %15 : vector<16x128xf32>
    %17 = arith.truncf %16 : vector<16x128xf32> to vector<16x128xbf16>
    %c0_12 = arith.constant 0 : index
    %c0_13 = arith.constant 0 : index
    %18 = vector.load %arg6[%c0_12, %c0_13] : memref<128x128xbf16, #tpu.memory_space<vmem>>, vector<128x128xbf16>
    %cst_14 = arith.constant dense<0.000000e+00> : vector<16x128xf32>
    %19 = tpu.matmul %17, %18, %cst_14 {dimension_numbers = #tpu.dot_dimension_numbers<[1], [0], [0], [1], [0, 0, 1, 1], [], []>} : vector<16x128xbf16>, vector<128x128xbf16>, vector<16x128xf32> -> vector<16x128xf32>
    %c0_15 = arith.constant 0 : index
    %c0_16 = arith.constant 0 : index
    %20 = vector.load %arg7[%c0_15, %c0_16] : memref<1x128xf32, #tpu.memory_space<vmem>>, vector<1x128xf32>
    %21 = vector.broadcast %20 : vector<1x128xf32> to vector<16x128xf32>
    %22 = arith.addf %19, %21 : vector<16x128xf32>
    %23 = arith.truncf %22 : vector<16x128xf32> to vector<16x128xbf16>
    %c0_17 = arith.constant 0 : index
    %c0_18 = arith.constant 0 : index
    %24 = vector.load %arg8[%c0_17, %c0_18] : memref<16x128xbf16, #tpu.memory_space<vmem>>, vector<16x128xbf16>
    tpu.vector_store %arg8[%c0_17, %c0_18], %23 {strides = array<i32>} : memref<16x128xbf16, #tpu.memory_space<vmem>>, vector<16x128xbf16>,
    return
  }
  func.func @transform_0(%arg0: i32) -> (i32, i32) {
    %c0_i32 = arith.constant 0 : i32
    %c0_i32_0 = arith.constant 0 : i32
    return %arg0, %c0_i32 : i32, i32
  }
  func.func @transform_1(%arg0: i32) -> (i32, i32) {
    %c0_i32 = arith.constant 0 : i32
    %c0_i32_0 = arith.constant 0 : i32
    %c0_i32_1 = arith.constant 0 : i32
    return %c0_i32, %c0_i32_0 : i32, i32
  }
  func.func @transform_2(%arg0: i32) -> (i32, i32) {
    %c0_i32 = arith.constant 0 : i32
    %c0_i32_0 = arith.constant 0 : i32
    %c0_i32_1 = arith.constant 0 : i32
    return %c0_i32, %c0_i32_0 : i32, i32
  }
  func.func @transform_3(%arg0: i32) -> (i32, i32) {
    %c0_i32 = arith.constant 0 : i32
    %c0_i32_0 = arith.constant 0 : i32
    %c0_i32_1 = arith.constant 0 : i32
    return %c0_i32, %c0_i32_0 : i32, i32
  }
  func.func @transform_4(%arg0: i32) -> (i32, i32) {
    %c0_i32 = arith.constant 0 : i32
    %c0_i32_0 = arith.constant 0 : i32
    %c0_i32_1 = arith.constant 0 : i32
    return %c0_i32, %c0_i32_0 : i32, i32
  }
  func.func @transform_5(%arg0: i32) -> (i32, i32) {
    %c0_i32 = arith.constant 0 : i32
    %c0_i32_0 = arith.constant 0 : i32
    %c0_i32_1 = arith.constant 0 : i32
    return %c0_i32, %c0_i32_0 : i32, i32
  }
  func.func @transform_6(%arg0: i32) -> (i32, i32) {
    %c0_i32 = arith.constant 0 : i32
    %c0_i32_0 = arith.constant 0 : i32
    %c0_i32_1 = arith.constant 0 : i32
    return %c0_i32, %c0_i32_0 : i32, i32
  }
  func.func @transform_7(%arg0: i32) -> (i32, i32) {
    %c0_i32 = arith.constant 0 : i32
    %c0_i32_0 = arith.constant 0 : i32
    return %arg0, %c0_i32 : i32, i32
  }
}

</mosaic_0001>

<llo_original>
// kernel: tpu_custom_call.1
$region0: #{tpu_custom_call.1}
  #allocation0 [shape = 'u32[]', space=smem, size = 0x4, offset = 0x4, fixed_abs, tag = 'smem constant byte address 0x4 - core index']
  #allocation1 [shape = 'u32[72,128]{1,0:T(1,128)}', space=vmem, size = 0x9000, scoped, tag = 'internal scratch']
  %s0 = inlined_call_operand.hbm [shape: f32[16,32], index: 0, kind: input, shape index: {}]
  %s1 = inlined_call_operand.hbm [shape: bf16[32,128], index: 1, kind: input, shape index: {}]
  %s2 = inlined_call_operand.vmem [shape: f32[1,128], index: 2, kind: input, shape index: {}]
  %s3 = inlined_call_operand.hbm [shape: bf16[128,128], index: 3, kind: input, shape index: {}]
  %s4 = inlined_call_operand.vmem [shape: f32[1,128], index: 4, kind: input, shape index: {}]
  %s5 = inlined_call_operand.hbm [shape: bf16[128,128], index: 5, kind: input, shape index: {}]
  %s6 = inlined_call_operand.vmem [shape: f32[1,128], index: 6, kind: input, shape index: {}]
  %s7 = inlined_call_operand.hbm [shape: bf16[16,128], index: 7, kind: output, shape index: {}]
  %s8 = sld [smem:[#allocation0]]
  $region54: #{tpu_custom_call.1} parent=0
    _
  %s10 = ssub.s32 1, %s8
  %s11 = scalar_select 0, %s10, %s8
  $region1: #{tpu_custom_call.1} parent=0
    #allocation2 [shape = 'u8[8192]{0}', space=vmem, size = 0x2000, scoped, tag = 'input window, operand 0, single buffered']
    #allocation3 [shape = 's32[1]{0}', space=sflag, size = 0x4, scoped, tag = 'scoped memory for tpu_custom_call.1']
    #allocation4 [shape = 's32[1]{0}', space=sflag, size = 0x4, scoped, tag = 'scoped memory for tpu_custom_call.1']
    #allocation5 [shape = 'u8[8192]{0}', space=vmem, size = 0x2000, scoped, tag = 'input window, operand 1, single buffered']
    #allocation6 [shape = 's32[1]{0}', space=sflag, size = 0x4, scoped, tag = 'scoped memory for tpu_custom_call.1']
    #allocation7 [shape = 'u8[32768]{0}', space=vmem, size = 0x8000, scoped, tag = 'input window, operand 3, single buffered']
    #allocation8 [shape = 'u8[32768]{0}', space=vmem, size = 0x8000, scoped, tag = 'input window, operand 5, single buffered']
    #allocation9 [shape = 's32[1]{0}', space=sflag, size = 0x4, scoped, tag = 'scoped memory for tpu_custom_call.1']
    #allocation10 [shape = 'u8[4096]{0}', space=vmem, size = 0x1000, scoped, tag = 'output window, operand 0, single buffered']
    %12 = vsyncpa [#allocation3], 0
    %13 = vsyncpa [#allocation6], 0
    %14 = vsyncpa [#allocation9], 0
    %15 = vsyncpa [#allocation4], 0
    // Predicated region
    $region2: #{tpu_custom_call.1} parent=1 // pred_check
      _
    $region3: #{tpu_custom_call.1} parent=1 // pred_check_branch
      %17 = sbr.rel (0) target = $region5
    $region4: #{tpu_custom_call.1} parent=1 // pred_region
      %19 = vsyncadd [#allocation3], 0
      %s20 = sshll.u32 %s0, 4
      %s21 = int_to_ptr.hbm [resolvable:$true] %s20
      %s22 = sshll.u32 [#allocation2], 4
      %s23 = int_to_ptr.vmem [resolvable:$true] %s22
      %28 = dma.hbm_to_vmem [thread:$0]  %s21, 256, %s23, [#allocation3], 128, 128, 8
    $region5: #{tpu_custom_call.1} parent=1 // pred_fallthru
      _
    // Predicated region
    $region6: #{tpu_custom_call.1} parent=1 // pred_check
      _
    $region7: #{tpu_custom_call.1} parent=1 // pred_check_branch
      %30 = sbr.rel (0) target = $region9
    $region8: #{tpu_custom_call.1} parent=1 // pred_region
      %32 = vsyncadd [#allocation6], 0
      %s33 = sshll.u32 %s1, 4
      %s34 = int_to_ptr.hbm [resolvable:$true] %s33
      %s35 = sshll.u32 [#allocation5], 4
      %s36 = int_to_ptr.vmem [resolvable:$true] %s35
      %41 = dma.hbm_to_vmem [thread:$0]  %s34, 256, %s36, [#allocation6], 64, 64, 4
    $region9: #{tpu_custom_call.1} parent=1 // pred_fallthru
      _
    // Predicated region
    $region10: #{tpu_custom_call.1} parent=1 // pred_check
      _
    $region11: #{tpu_custom_call.1} parent=1 // pred_check_branch
      %43 = sbr.rel (0) target = $region13
    $region12: #{tpu_custom_call.1} parent=1 // pred_region
      _
    $region13: #{tpu_custom_call.1} parent=1 // pred_fallthru
      _
    // Predicated region
    $region14: #{tpu_custom_call.1} parent=1 // pred_check
      _
    $region15: #{tpu_custom_call.1} parent=1 // pred_check_branch
      %45 = sbr.rel (0) target = $region17
    $region16: #{tpu_custom_call.1} parent=1 // pred_region
      %47 = vsyncadd [#allocation6], 0
      %s48 = sshll.u32 %s3, 4
      %s49 = int_to_ptr.hbm [resolvable:$true] %s48
      %s50 = sshll.u32 [#allocation7], 4
      %s51 = int_to_ptr.vmem [resolvable:$true] %s50
      %56 = dma.hbm_to_vmem [thread:$0]  %s49, 1024, %s51, [#allocation6], 64, 64, 4
    $region17: #{tpu_custom_call.1} parent=1 // pred_fallthru
      _
    // Predicated region
    $region18: #{tpu_custom_call.1} parent=1 // pred_check
      _
    $region19: #{tpu_custom_call.1} parent=1 // pred_check_branch
      %58 = sbr.rel (0) target = $region21
    $region20: #{tpu_custom_call.1} parent=1 // pred_region
      _
    $region21: #{tpu_custom_call.1} parent=1 // pred_fallthru
      _
    // Predicated region
    $region22: #{tpu_custom_call.1} parent=1 // pred_check
      _
    $region23: #{tpu_custom_call.1} parent=1 // pred_check_branch
      %60 = sbr.rel (0) target = $region25
    $region24: #{tpu_custom_call.1} parent=1 // pred_region
      %62 = vsyncadd [#allocation9], 0
      %s63 = sshll.u32 %s5, 4
      %s64 = int_to_ptr.hbm [resolvable:$true] %s63
      %s65 = sshll.u32 [#allocation8], 4
      %s66 = int_to_ptr.vmem [resolvable:$true] %s65
      %71 = dma.hbm_to_vmem [thread:$0]  %s64, 1024, %s66, [#allocation9], 64, 64, 4
    $region25: #{tpu_custom_call.1} parent=1 // pred_fallthru
      _
    // Predicated region
    $region26: #{tpu_custom_call.1} parent=1 // pred_check
      _
    $region27: #{tpu_custom_call.1} parent=1 // pred_check_branch
      %73 = sbr.rel (0) target = $region29
    $region28: #{tpu_custom_call.1} parent=1 // pred_region
      _
    $region29: #{tpu_custom_call.1} parent=1 // pred_fallthru
      _
    // Predicated region
    $region30: #{tpu_custom_call.1} parent=1 // pred_check
      _
    $region31: #{tpu_custom_call.1} parent=1 // pred_check_branch
      %75 = sbr.rel (0) target = $region33
    $region32: #{tpu_custom_call.1} parent=1 // pred_region
      %77 = dma.done [#allocation3], 256
    $region33: #{tpu_custom_call.1} parent=1 // pred_fallthru
      _
    // Predicated region
    $region34: #{tpu_custom_call.1} parent=1 // pred_check
      _
    $region35: #{tpu_custom_call.1} parent=1 // pred_check_branch
      %79 = sbr.rel (0) target = $region37
    $region36: #{tpu_custom_call.1} parent=1 // pred_region
      %81 = dma.done [#allocation6], 256
    $region37: #{tpu_custom_call.1} parent=1 // pred_fallthru
      _
    // Predicated region
    $region38: #{tpu_custom_call.1} parent=1 // pred_check
      _
    $region39: #{tpu_custom_call.1} parent=1 // pred_check_branch
      %83 = sbr.rel (0) target = $region41
    $region40: #{tpu_custom_call.1} parent=1 // pred_region
      %85 = dma.done [#allocation6], 1024
    $region41: #{tpu_custom_call.1} parent=1 // pred_fallthru
      _
    // Predicated region
    $region42: #{tpu_custom_call.1} parent=1 // pred_check
      _
    $region43: #{tpu_custom_call.1} parent=1 // pred_check_branch
      %87 = sbr.rel (0) target = $region45
    $region44: #{tpu_custom_call.1} parent=1 // pred_region
      %89 = dma.done [#allocation9], 1024
    $region45: #{tpu_custom_call.1} parent=1 // pred_fallthru
      _
    %v91 = vld [vmem:[#allocation2] sm:$0xff]
    %v92 = vld [vmem:[#allocation2 + $0x8] sm:$0xff]
    %v93 = vpack.c.bf16 %v92, %v91
    %v94 = vld [vmem:[#allocation5] sm:$0xf]
    %v95 = vld [vmem:[#allocation5 + $0x4] sm:$0xf]
    %v96 = vld [vmem:[#allocation5 + $0x8] sm:$0xf]
    %v97 = vld [vmem:[#allocation5 + $0xc] sm:$0xf]
    %v98 = vld [vmem:[%s2] sm:$0x1]
    %v100 = vperm.slane %v98, 0
    %v106 = vunpack.c.l.b16 %v94
    %v107 = vunpack.c.l.b16 %v95
    %v108 = vunpack.c.l.b16 %v96
    %v109 = vunpack.c.l.b16 %v97
    %v110 = vpack.c.b16 %v107, %v106
    %v111 = vpack.c.b16 %v109, %v108
    %vm114 = vcmask 261120
    %v116 = vsel %vm114, %v93, 0
    %118 = vmatpush.bf16.msra.mxu0 0
    %119 = vmatpush.bf16.msra.mxu0 0
    %120 = vmatpush.bf16.msra.mxu0 0
    %121 = vmatpush.bf16.msra.mxu0 0
    %122 = vmatpush.bf16.msra.mxu0 0
    %123 = vmatpush.bf16.msra.mxu0 0
    %124 = vmatpush.bf16.msra.mxu0 %v111
    %125 = vmatpush.bf16.msra.mxu0 %v110
    %126 = vmatmul.bf16.gmra.mxu0 %v116
    %v127 = vpop.f32.mrf.mxu0
    %v128 = vadd.f32 %v100, %v127
    %v129 = vpop.f32.mrf.mxu0
    %v130 = vadd.f32 %v100, %v129
    %131 = vdwg.mxu0
    %v132 = vmax.f32 %v128, 0.0
    %v133 = vmax.f32 %v130, 0.0
    %v134 = vpack.c.bf16 %v133, %v132
    %v135 = vld [vmem:[#allocation7] sm:$0xf]
    %v136 = vld [vmem:[#allocation7 + $0x4] sm:$0xf]
    %v137 = vld [vmem:[#allocation7 + $0x8] sm:$0xf]
    %v138 = vld [vmem:[#allocation7 + $0xc] sm:$0xf]
    %v139 = vld [vmem:[#allocation7 + $0x10] sm:$0xf]
    %v140 = vld [vmem:[#allocation7 + $0x14] sm:$0xf]
    %v141 = vld [vmem:[#allocation7 + $0x18] sm:$0xf]
    %v142 = vld [vmem:[#allocation7 + $0x1c] sm:$0xf]
    %v143 = vld [vmem:[#allocation7 + $0x20] sm:$0xf]
    %v144 = vld [vmem:[#allocation7 + $0x24] sm:$0xf]
    %v145 = vld [vmem:[#allocation7 + $0x28] sm:$0xf]
    %v146 = vld [vmem:[#allocation7 + $0x2c] sm:$0xf]
    %v147 = vld [vmem:[#allocation7 + $0x30] sm:$0xf]
    %v148 = vld [vmem:[#allocation7 + $0x34] sm:$0xf]
    %v149 = vld [vmem:[#allocation7 + $0x38] sm:$0xf]
    %v150 = vld [vmem:[#allocation7 + $0x3c] sm:$0xf]
    %v151 = vld [vmem:[%s4] sm:$0x1]
    %v153 = vperm.slane %v151, 0
    %v171 = vunpack.c.l.b16 %v135
    %v172 = vunpack.c.l.b16 %v136
    %v173 = vunpack.c.l.b16 %v137
    %v174 = vunpack.c.l.b16 %v138
    %v175 = vunpack.c.l.b16 %v139
    %v176 = vunpack.c.l.b16 %v140
    %v177 = vunpack.c.l.b16 %v141
    %v178 = vunpack.c.l.b16 %v142
    %v179 = vunpack.c.l.b16 %v143
    %v180 = vunpack.c.l.b16 %v144
    %v181 = vunpack.c.l.b16 %v145
    %v182 = vunpack.c.l.b16 %v146
    %v183 = vunpack.c.l.b16 %v147
    %v184 = vunpack.c.l.b16 %v148
    %v185 = vunpack.c.l.b16 %v149
    %v186 = vunpack.c.l.b16 %v150
    %v187 = vpack.c.b16 %v172, %v171
    %v188 = vpack.c.b16 %v174, %v173
    %v189 = vpack.c.b16 %v176, %v175
    %v190 = vpack.c.b16 %v178, %v177
    %v191 = vpack.c.b16 %v180, %v179
    %v192 = vpack.c.b16 %v182, %v181
    %v193 = vpack.c.b16 %v184, %v183
    %v194 = vpack.c.b16 %v186, %v185
    %203 = vmatpush.bf16.msra.mxu0 %v194
    %204 = vmatpush.bf16.msra.mxu0 %v193
    %205 = vmatpush.bf16.msra.mxu0 %v192
    %206 = vmatpush.bf16.msra.mxu0 %v191
    %207 = vmatpush.bf16.msra.mxu0 %v190
    %208 = vmatpush.bf16.msra.mxu0 %v189
    %209 = vmatpush.bf16.msra.mxu0 %v188
    %210 = vmatpush.bf16.msra.mxu0 %v187
    %211 = vmatmul.bf16.gmra.mxu0 %v134
    %v212 = vpop.f32.mrf.mxu0
    %v213 = vadd.f32 %v153, %v212
    %v214 = vpop.f32.mrf.mxu0
    %v215 = vadd.f32 %v153, %v214
    %216 = vdwg.mxu0
    %v217 = vmax.f32 %v213, 0.0
    %v218 = vmax.f32 %v215, 0.0
    %v219 = vpack.c.bf16 %v218, %v217
    %v220 = vld [vmem:[#allocation8] sm:$0xf]
    %v221 = vld [vmem:[#allocation8 + $0x4] sm:$0xf]
    %v222 = vld [vmem:[#allocation8 + $0x8] sm:$0xf]
    %v223 = vld [vmem:[#allocation8 + $0xc] sm:$0xf]
    %v224 = vld [vmem:[#allocation8 + $0x10] sm:$0xf]
    %v225 = vld [vmem:[#allocation8 + $0x14] sm:$0xf]
    %v226 = vld [vmem:[#allocation8 + $0x18] sm:$0xf]
    %v227 = vld [vmem:[#allocation8 + $0x1c] sm:$0xf]
    %v228 = vld [vmem:[#allocation8 + $0x20] sm:$0xf]
    %v229 = vld [vmem:[#allocation8 + $0x24] sm:$0xf]
    %v230 = vld [vmem:[#allocation8 + $0x28] sm:$0xf]
    %v231 = vld [vmem:[#allocation8 + $0x2c] sm:$0xf]
    %v232 = vld [vmem:[#allocation8 + $0x30] sm:$0xf]
    %v233 = vld [vmem:[#allocation8 + $0x34] sm:$0xf]
    %v234 = vld [vmem:[#allocation8 + $0x38] sm:$0xf]
    %v235 = vld [vmem:[#allocation8 + $0x3c] sm:$0xf]
    %v236 = vld [vmem:[%s6] sm:$0x1]
    %v238 = vperm.slane %v236, 0
    %v256 = vunpack.c.l.b16 %v220
    %v257 = vunpack.c.l.b16 %v221
    %v258 = vunpack.c.l.b16 %v222
    %v259 = vunpack.c.l.b16 %v223
    %v260 = vunpack.c.l.b16 %v224
    %v261 = vunpack.c.l.b16 %v225
    %v262 = vunpack.c.l.b16 %v226
    %v263 = vunpack.c.l.b16 %v227
    %v264 = vunpack.c.l.b16 %v228
    %v265 = vunpack.c.l.b16 %v229
    %v266 = vunpack.c.l.b16 %v230
    %v267 = vunpack.c.l.b16 %v231
    %v268 = vunpack.c.l.b16 %v232
    %v269 = vunpack.c.l.b16 %v233
    %v270 = vunpack.c.l.b16 %v234
    %v271 = vunpack.c.l.b16 %v235
    %v272 = vpack.c.b16 %v257, %v256
    %v273 = vpack.c.b16 %v259, %v258
    %v274 = vpack.c.b16 %v261, %v260
    %v275 = vpack.c.b16 %v263, %v262
    %v276 = vpack.c.b16 %v265, %v264
    %v277 = vpack.c.b16 %v267, %v266
    %v278 = vpack.c.b16 %v269, %v268
    %v279 = vpack.c.b16 %v271, %v270
    %288 = vmatpush.bf16.msra.mxu0 %v279
    %289 = vmatpush.bf16.msra.mxu0 %v278
    %290 = vmatpush.bf16.msra.mxu0 %v277
    %291 = vmatpush.bf16.msra.mxu0 %v276
    %292 = vmatpush.bf16.msra.mxu0 %v275
    %293 = vmatpush.bf16.msra.mxu0 %v274
    %294 = vmatpush.bf16.msra.mxu0 %v273
    %295 = vmatpush.bf16.msra.mxu0 %v272
    %296 = vmatmul.bf16.gmra.mxu0 %v219
    %v297 = vpop.f32.mrf.mxu0
    %v298 = vadd.f32 %v238, %v297
    %v299 = vpop.f32.mrf.mxu0
    %v300 = vadd.f32 %v238, %v299
    %301 = vdwg.mxu0
    %v302 = vpack.c.bf16 %v298, %v298
    %v303 = vpack.c.bf16 %v300, %v300
    %304 = vst [vmem:[#allocation10] sm:$0xf] %v302
    %305 = vst [vmem:[#allocation10 + $0x4] sm:$0xf] %v303
    // Predicated region
    $region46: #{tpu_custom_call.1} parent=1 // pred_check
      _
    $region47: #{tpu_custom_call.1} parent=1 // pred_check_branch
      %307 = sbr.rel (0) target = $region49
    $region48: #{tpu_custom_call.1} parent=1 // pred_region
      %309 = vsyncadd [#allocation4], 0
      %s310 = sshll.u32 [#allocation10], 4
      %s311 = int_to_ptr.vmem [resolvable:$true] %s310
      %s312 = sshll.u32 %s7, 4
      %s313 = int_to_ptr.hbm [resolvable:$true] %s312
      %318 = dma.vmem_to_hbm [thread:$0]  %s311, 128, %s313, [#allocation4], 64, 64, 4
    $region49: #{tpu_custom_call.1} parent=1 // pred_fallthru
      _
    // Predicated region
    $region50: #{tpu_custom_call.1} parent=1 // pred_check
      _
    $region51: #{tpu_custom_call.1} parent=1 // pred_check_branch
      %320 = sbr.rel (0) target = $region53
    $region52: #{tpu_custom_call.1} parent=1 // pred_region
      %322 = dma.done [#allocation4], 128
    $region53: #{tpu_custom_call.1} parent=1 // pred_fallthru
      _
    %323 = vsyncpa [#allocation3], 1
    %324 = vsyncpa [#allocation6], 1
    %325 = vsyncpa [#allocation9], 1
    %326 = vsyncpa [#allocation4], 1

</llo_original>
